<compile_context>
chip_gen: v7x
topology: tpu7x:2x2x1
jax: 0.10.0
libtpu: 0.0.40
codegen_flags: <defaults>
</compile_context>

<pallas_src>
import functools

import jax
import jax.numpy as jnp
from jax.experimental import pallas as pl
from jax.experimental.pallas import tpu as pltpu


def _round_up(x, m):
    return (x + m - 1) // m * m


def _vmem_limit_bytes():
    """~3/4 of physical VMEM: ~48 MiB per-TC on v7x, ~96 MiB on v5e/v6e."""
    cap = None
    try:
        cap = getattr(pltpu.get_tpu_info(), "vmem_capacity_bytes", None)
    except Exception:
        cap = None
    if not cap:
        cap = 64 << 20  # conservative fallback (v7x physical per-TC VMEM)
    return int(cap) * 3 // 4


def _default_tile_n():
    # Roofline-driven per-chip defaults: v6e needs ~1024 tokens per expert-weight
    # byte to be MXU-bound on the weight stream, v5e is compute-bound at ~256,
    # v7x at ~512 (and its 64 MiB/TC budget should go to the d-tile instead).
    try:
        name = str(getattr(pltpu.get_tpu_info(), "chip_version", "")).lower()
        if "6" in name:
            return 1024
        if "5" in name:
            return 256
    except Exception:
        pass
    return 512


def _adamoe_kernel(x_ref, wgt_ref, bgt_ref, we_ref, bst_ref,      # inputs
                   out_ref, stats_ref,                            # outputs
                   acc_ref, w_ref,                                 # VMEM scratch
                   *, num_experts, max_threshold, n_tokens, tile_n, gt_pad):
    # All grid-position reads happen at the kernel top level (NOT inside pl.when
    # branches) so the interpret/CPU fallback can lower the cond sub-jaxprs.
    tok_idx = pl.program_id(0)
    d_idx = pl.program_id(1)
    e_idx = pl.program_id(2)
    n_exp = pl.num_programs(2)
    tok0 = tok_idx * tile_n

    # ---- routing: computed once per token tile (first d-tile, first expert) ----
    @pl.when((d_idx == 0) & (e_idx == 0))
    def _routing():
        x = x_ref[...]                                            # (TN, H) bf16
        # One fused lane-dense matmul: cols [0,E) = gate logits, col E = threshold.
        gt = jnp.dot(x, wgt_ref[...],
                     preferred_element_type=jnp.float32) + bgt_ref[...]   # (TN, GT)

        lane = jax.lax.broadcasted_iota(jnp.int32, gt.shape, 1)
        gate_mask = lane < num_experts

        # softmax over the real expert lanes (padding masked out), f32 math.
        logits = jnp.where(gate_mask, gt, jnp.float32(-1e30))
        logits = logits - jnp.max(logits, axis=-1, keepdims=True)
        ex = jnp.where(gate_mask, jnp.exp(logits), 0.0)
        gate_probs = ex / jnp.sum(ex, axis=-1, keepdims=True)

        # adaptive threshold: sigmoid(x @ Wt + bt) * max_threshold
        t_logit = jnp.sum(jnp.where(lane == num_experts, gt, 0.0),
                          axis=-1, keepdims=True)                 # (TN, 1)
        thr = max_threshold / (1.0 + jnp.exp(-t_logit))

        adapted = jnp.where(gate_mask, gate_probs - thr, 0.0)
        selected = jnp.where(gate_mask, (adapted >= 0.0).astype(jnp.float32), 0.0)

        w = adapted * selected
        wsum = jnp.sum(w, axis=-1, keepdims=True)
        wsum = jnp.where(wsum == 0.0, jnp.float32(1.0), wsum)
        w = w / wsum   # exact divide: these weights scale every output element

        # Padded token rows (>= n_tokens) get bias-only logits; zero their
        # routing weights so padded output rows are exactly zero.
        rows = jax.lax.broadcasted_iota(jnp.int32, (tile_n, 1), 0) + tok0
        valid = (rows < n_tokens).astype(jnp.float32)
        w_ref[...] = w * valid                                    # (TN, GT)

        # Per-tile partial sums for the Switch-Transformer load-balancing loss
        # (matches PyTorch: expert_probs uses *adapted* gate logits, ge(., 0)).
        a_sum = jnp.sum(adapted * valid, axis=0, keepdims=True)   # (1, GT)
        s_sum = jnp.sum(selected * valid, axis=0, keepdims=True)  # (1, GT)
        srow = jax.lax.broadcasted_iota(jnp.int32, (8, gt_pad), 0)
        stats_ref[...] = jnp.where(
            srow == 0, jnp.broadcast_to(a_sum, (8, gt_pad)),
            jnp.where(srow == 1, jnp.broadcast_to(s_sum, (8, gt_pad)), 0.0))

    @pl.when(e_idx == 0)
    def _init():
        acc_ref[...] = jnp.zeros_like(acc_ref)

    # ---- one (expert, d-tile) per grid step: weighted accumulate --------------
    # TODO(synk): the lane extraction could be a single dynamic pltpu.roll +
    # static slice instead of select+reduce; kept portable for interpret mode.
    lane = jax.lax.broadcasted_iota(jnp.int32, w_ref.shape, 1)
    w_e = jnp.sum(jnp.where(lane == e_idx, w_ref[...], 0.0),
                  axis=-1, keepdims=True)                         # (TN, 1)
    acc_ref[...] += w_e * jnp.dot(x_ref[...], we_ref[...],
                                  preferred_element_type=jnp.float32)

    @pl.when(e_idx == n_exp - 1)
    def _finish():
        # Expert biases folded in once via a tiny MXU matmul: sum_e w_e * b_e.
        # (Replaces E full-tile VALU adds per token tile.)
        final = acc_ref[...] + jnp.dot(w_ref[...], bst_ref[...],
                                       preferred_element_type=jnp.float32)
        out_ref[...] = final.astype(out_ref.dtype)


def adamoe_forward(inputs, wg, bg, wt, bt, we, be, *, max_threshold,
                   tile_n=None, matmul_dtype=jnp.bfloat16, compute_loss=True):
    """inputs: (..., H). Returns (results (..., d_out), layer_loss (1,))."""
    H = inputs.shape[-1]
    E, _, d_out = we.shape
    x = inputs.reshape((-1, H))
    n = x.shape[0]

    d_pad = _round_up(d_out, 128)
    gt_pad = _round_up(E + 1, 128)

    if tile_n is None:
        tile_n = _default_tile_n()
    vmem_limit = _vmem_limit_bytes()

    # ---- VMEM-aware tile sizing ------------------------------------------------
    def vmem_usage(tn, dt):
        return (2 * tn * H * 2            # x tile, double-buffered bf16
                + 2 * H * gt_pad * 2      # fused gate/threshold weights (bf16)
                + 2 * gt_pad * 4          # fused gate/threshold bias (f32)
                + 2 * H * dt * 2          # expert-weight d-tile, double-buffered
                + 2 * gt_pad * dt * 4     # stacked expert biases (f32)
                + 2 * tn * dt * 2         # bf16 output tile, double-buffered
                + tn * dt * 4             # f32 accumulator scratch
                + tn * gt_pad * 4         # cached routing-weight scratch
                + 2 * 8 * gt_pad * 4)     # stats tile

    tn = min(_round_up(tile_n, 16), _round_up(n, 16))
    d_tile = d_pad
    # d-tiling first: shrinks the expert-weight block, the accumulator and the
    # output buffers (mandatory for v7x with large H * d_out).
    while vmem_usage(tn, d_tile) > vmem_limit and d_tile % 256 == 0:
        d_tile //= 2
    while vmem_usage(tn, d_tile) > vmem_limit and tn > 16:
        tn = max(16, _round_up(tn // 2, 16))

    n_pad = _round_up(n, tn)
    num_tiles = n_pad // tn
    num_d = d_pad // d_tile

    # ---- host-side packing / padding (no f32 round-trip; pad only if needed) ---
    x_m = x.astype(matmul_dtype)
    x_p = x_m if n_pad == n else jnp.pad(x_m, ((0, n_pad - n), (0, 0)))
    w_gt = jnp.concatenate(
        [wg, wt, jnp.zeros((H, gt_pad - (E + 1)), wg.dtype)], axis=1
    ).astype(matmul_dtype)
    b_gt = jnp.concatenate(
        [bg.reshape(1, E), bt.reshape(1, 1),
         jnp.zeros((1, gt_pad - (E + 1)), jnp.float32)], axis=1).astype(jnp.float32)
    we_p = jnp.pad(we.astype(matmul_dtype), ((0, 0), (0, 0), (0, d_pad - d_out)))
    b_stack = jnp.zeros((gt_pad, d_pad), jnp.float32)
    b_stack = b_stack.at[:E, :d_out].set(be.reshape(E, d_out).astype(jnp.float32))

    kernel = functools.partial(
        _adamoe_kernel, num_experts=E, max_threshold=float(max_threshold),
        n_tokens=n, tile_n=tn, gt_pad=gt_pad)

    bf = jnp.dtype(matmul_dtype).itemsize
    cost = pl.CostEstimate(
        flops=2 * n_pad * H * (gt_pad + E * d_pad) + 2 * n_pad * gt_pad * d_pad,
        transcendentals=n_pad * (E + 1),
        bytes_accessed=(x_p.size * bf + w_gt.size * bf + b_gt.size * 4
                        + num_tiles * we_p.size * bf
                        + num_tiles * b_stack.size * 4
                        + n_pad * d_pad * 2 + num_tiles * 8 * gt_pad * 4))

    # TODO(synk): mark the constant-index operands (w_gt / b_gt) with
    # pipeline_mode=pl.Buffered(1) to save their second VMEM buffer on v7x.
    out_pad, stats = pl.pallas_call(
        kernel,
        out_shape=(
            jax.ShapeDtypeStruct((n_pad, d_pad), jnp.bfloat16),  # bf16: halves writeback
            jax.ShapeDtypeStruct((num_tiles, 8, gt_pad), jnp.float32),
        ),
        grid_spec=pltpu.PrefetchScalarGridSpec(
            num_scalar_prefetch=0,
            grid=(num_tiles, num_d, E),
            in_specs=[
                pl.BlockSpec((tn, H), lambda i, j, e: (i, 0)),             # x (resident over j,e)
                pl.BlockSpec((H, gt_pad), lambda i, j, e: (0, 0)),         # fused gate+threshold W
                pl.BlockSpec((1, gt_pad), lambda i, j, e: (0, 0)),         # fused gate+threshold b
                pl.BlockSpec((None, H, d_tile), lambda i, j, e: (e, 0, j)),  # expert weight d-tile
                pl.BlockSpec((gt_pad, d_tile), lambda i, j, e: (0, j)),    # stacked expert biases
            ],
            out_specs=(
                pl.BlockSpec((tn, d_tile), lambda i, j, e: (i, j)),
                pl.BlockSpec((None, 8, gt_pad), lambda i, j, e: (i, 0, 0)),
            ),
            scratch_shapes=[
                pltpu.VMEM((tn, d_tile), jnp.float32),   # expert-sum accumulator
                pltpu.VMEM((tn, gt_pad), jnp.float32),   # cached routing weights
            ]),
        compiler_params=pltpu.CompilerParams(
            # Only the token axis is "parallel": the routing scratch written at
            # (j==0, e==0) is reused across the d / expert axes, so those stay
            # sequential on one core and megacore output blocks stay disjoint.
            dimension_semantics=("parallel", "arbitrary", "arbitrary"),
            vmem_limit_bytes=vmem_limit),
        cost_estimate=cost,
    )(x_p, w_gt, b_gt, we_p, b_stack)

    results = out_pad[:n, :d_out].astype(inputs.dtype)
    results = results.reshape((*inputs.shape[:-1], d_out))

    if not compute_loss:
        # PyTorch returns 0.0 when inputs.requires_grad is False.
        # TODO(synk): drop the stats output entirely on pure-inference paths.
        return results, jnp.zeros((1,), jnp.float32)

    # Load-balancing loss (Switch-Transformer style) from per-tile partial sums.
    adapted_sums = jnp.sum(stats[:, 0, :E], axis=0)
    sel_sums = jnp.sum(stats[:, 1, :E], axis=0)
    expert_fractions = sel_sums / n
    expert_probs = adapted_sums / n
    layer_loss = (E * jnp.sum(expert_fractions * expert_probs))[None]
    return results, layer_loss


def _reference(inputs, wg, bg, wt, bt, we, be, *, max_threshold,
               matmul_dtype=jnp.bfloat16):
    """Pure-JAX reference mirroring the PyTorch forward (bf16 matmuls, f32 accum)."""
    H = inputs.shape[-1]
    E, _, d_out = we.shape
    x = inputs.reshape((-1, H)).astype(jnp.float32)
    n = x.shape[0]
    xm = x.astype(matmul_dtype)

    gate_logits = jnp.dot(xm, wg.astype(matmul_dtype),
                          preferred_element_type=jnp.float32) + bg
    gate = jax.nn.softmax(gate_logits, axis=-1)
    t_logit = jnp.dot(xm, wt.astype(matmul_dtype),
                      preferred_element_type=jnp.float32) + bt
    thr = max_threshold / (1.0 + jnp.exp(-t_logit))
    adapted = gate - thr
    selected = (adapted >= 0).astype(jnp.float32)
    w = adapted * selected
    ws = jnp.sum(w, axis=-1, keepdims=True)
    ws = jnp.where(ws == 0, jnp.ones_like(ws), ws)
    w = w / ws

    expert_outs = jnp.einsum('nh,ehd->ned', xm, we.astype(matmul_dtype),
                             preferred_element_type=jnp.float32)
    expert_outs = expert_outs + be.reshape(E, d_out)[None, :, :]
    res = jnp.einsum('ne,ned->nd', w, expert_outs)
    results = res.reshape((*inputs.shape[:-1], d_out))

    expert_fractions = jnp.sum(selected, axis=0) / n
    expert_probs = jnp.sum(adapted, axis=0) / n
    layer_loss = (E * jnp.sum(expert_fractions * expert_probs))[None]
    return results, layer_loss


if __name__ == "__main__":
    key = jax.random.PRNGKey(0)
    k_x, k_wg, k_bg, k_wt, k_bt, k_we, k_be = jax.random.split(key, 7)

    batch, seq, hidden, d_out, num_experts = 2, 8, 32, 32, 8
    max_threshold = 0.1

    inputs = jax.random.normal(k_x, (batch, seq, hidden), jnp.float32)

    # Deterministic synthetic parameters (shapes follow the module).
    wg = jax.random.normal(k_wg, (hidden, num_experts), jnp.float32) * 0.1
    bg = jax.random.normal(k_bg, (1, num_experts), jnp.float32) * 0.1
    wt = jax.random.normal(k_wt, (hidden, 1), jnp.float32) * 0.1
    bt = jax.random.normal(k_bt, (1, 1), jnp.float32) * 0.1
    we = jax.random.normal(k_we, (num_experts, hidden, d_out), jnp.float32) * 0.1
    be = jax.random.normal(k_be, (num_experts, 1, d_out), jnp.float32) * 0.1

    results, layer_loss = adamoe_forward(
        inputs, wg, bg, wt, bt, we, be, max_threshold=max_threshold)
    jax.block_until_ready((results, layer_loss))

    ref_res, ref_loss = _reference(
        inputs, wg, bg, wt, bt, we, be, max_threshold=max_threshold)

    assert results.shape == (batch, seq, d_out)
    assert layer_loss.shape == (1,)
    assert jnp.allclose(results, ref_res, atol=2e-2, rtol=2e-2), "results mismatch vs reference"
    assert jnp.allclose(layer_loss, ref_loss, atol=1e-2, rtol=1e-2), "loss mismatch vs reference"

    print("KERNEL_OK")
</pallas_src>

<mosaic_0001>
module attributes {stable_mosaic.version = 11 : i64} {
  func.func @_adamoe_kernel(%arg0: i32, %arg1: i32, %arg2: i32, %arg3: memref<16x32xbf16, #tpu.memory_space<vmem>>, %arg4: memref<32x128xbf16, #tpu.memory_space<vmem>>, %arg5: memref<1x128xf32, #tpu.memory_space<vmem>>, %arg6: memref<1x32x128xbf16, #tpu.memory_space<vmem>>, %arg7: memref<128x128xf32, #tpu.memory_space<vmem>>, %arg8: memref<16x128xbf16, #tpu.memory_space<vmem>>, %arg9: memref<1x8x128xf32, #tpu.memory_space<vmem>>, %arg10: memref<16x128xf32, #tpu.memory_space<vmem>>, %arg11: memref<16x128xf32, #tpu.memory_space<vmem>>) attributes {dimension_semantics = [#tpu.dimension_semantics<parallel>, #tpu.dimension_semantics<arbitrary>, #tpu.dimension_semantics<arbitrary>], iteration_bounds = array<i64: 1, 1, 8>, scalar_prefetch = 0 : i64, scratch_operands = 2 : i64, tpu.core_type = #tpu.core_type<tc>, window_params = [{transform_indices = @transform_0, window_bounds = array<i64: 16, 32>}, {pipeline_mode = #tpu.pipeline_mode<synchronous>, transform_indices = @transform_1, window_bounds = array<i64: 32, 128>}, {pipeline_mode = #tpu.pipeline_mode<synchronous>, transform_indices = @transform_2, window_bounds = array<i64: 1, 128>}, {transform_indices = @transform_3, window_bounds = array<i64: 1, 32, 128>}, {transform_indices = @transform_4, window_bounds = array<i64: 128, 128>}, {transform_indices = @transform_5, window_bounds = array<i64: 16, 128>}, {transform_indices = @transform_6, window_bounds = array<i64: 1, 8, 128>}]} {
    %c16_i32 = arith.constant 16 : i32
    %0 = arith.muli %arg0, %c16_i32 : i32
    %c0_i32 = arith.constant 0 : i32
    %1 = arith.cmpi eq, %arg1, %c0_i32 : i32
    %c0_i32_0 = arith.constant 0 : i32
    %2 = arith.cmpi eq, %arg2, %c0_i32_0 : i32
    %3 = arith.andi %1, %2 : i1
    %4 = arith.extui %3 : i1 to i32
    %c0_i32_1 = arith.constant 0 : i32
    %5 = arith.cmpi ne, %4, %c0_i32_1 : i32
    scf.if %5 {
      %c0_17 = arith.constant 0 : index
      %c0_18 = arith.constant 0 : index
      %29 = vector.load %arg3[%c0_17, %c0_18] : memref<16x32xbf16, #tpu.memory_space<vmem>>, vector<16x32xbf16>
      %c0_19 = arith.constant 0 : index
      %c0_20 = arith.constant 0 : index
      %30 = vector.load %arg4[%c0_19, %c0_20] : memref<32x128xbf16, #tpu.memory_space<vmem>>, vector<32x128xbf16>
      %cst_21 = arith.constant dense<0.000000e+00> : vector<16x128xf32>
      %31 = tpu.matmul %29, %30, %cst_21 {dimension_numbers = #tpu.dot_dimension_numbers<[1], [0], [0], [1], [0, 0, 1, 1], [], []>} : vector<16x32xbf16>, vector<32x128xbf16>, vector<16x128xf32> -> vector<16x128xf32>
      %c0_22 = arith.constant 0 : index
      %c0_23 = arith.constant 0 : index
      %32 = vector.load %arg5[%c0_22, %c0_23] : memref<1x128xf32, #tpu.memory_space<vmem>>, vector<1x128xf32>
      %33 = vector.broadcast %32 : vector<1x128xf32> to vector<16x128xf32>
      %34 = arith.addf %31, %33 : vector<16x128xf32>
      %35 = tpu.iota {dimensions = array<i32: 1>} : vector<16x128xi32>
      %c8_i32 = arith.constant 8 : i32
      %36 = vector.broadcast %c8_i32 : i32 to vector<16x128xi32>
      %37 = arith.cmpi slt, %35, %36 : vector<16x128xi32>
      %cst_24 = arith.constant -1.000000e+30 : f32
      %38 = vector.broadcast %cst_24 : f32 to vector<16x128xf32>
      %39 = arith.select %37, %34, %38 : vector<16x128xi1>, vector<16x128xf32>
      %cst_25 = arith.constant dense<0xFF800000> : vector<16xf32>
      %40 = vector.multi_reduction <maximumf>, %39, %cst_25 [1] : vector<16x128xf32> to vector<16xf32>
      %41 = vector.shape_cast %40 : vector<16xf32> to vector<16x1xf32>
      %42 = vector.broadcast %41 : vector<16x1xf32> to vector<16x128xf32>
      %43 = arith.subf %39, %42 : vector<16x128xf32>
      %44 = math.exp %43 : vector<16x128xf32>
      %cst_26 = arith.constant 0.000000e+00 : f32
      %45 = vector.broadcast %cst_26 : f32 to vector<16x128xf32>
      %46 = arith.select %37, %44, %45 : vector<16x128xi1>, vector<16x128xf32>
      %cst_27 = arith.constant dense<0.000000e+00> : vector<16xf32>
      %47 = vector.multi_reduction <add>, %46, %cst_27 [1] : vector<16x128xf32> to vector<16xf32>
      %48 = vector.shape_cast %47 : vector<16xf32> to vector<16x1xf32>
      %49 = vector.broadcast %48 : vector<16x1xf32> to vector<16x128xf32>
      %50 = arith.divf %46, %49 : vector<16x128xf32>
      %c8_i32_28 = arith.constant 8 : i32
      %51 = vector.broadcast %c8_i32_28 : i32 to vector<16x128xi32>
      %52 = arith.cmpi eq, %35, %51 : vector<16x128xi32>
      %cst_29 = arith.constant 0.000000e+00 : f32
      %53 = vector.broadcast %cst_29 : f32 to vector<16x128xf32>
      %54 = arith.select %52, %34, %53 : vector<16x128xi1>, vector<16x128xf32>
      %cst_30 = arith.constant dense<0.000000e+00> : vector<16xf32>
      %55 = vector.multi_reduction <add>, %54, %cst_30 [1] : vector<16x128xf32> to vector<16xf32>
      %56 = vector.shape_cast %55 : vector<16xf32> to vector<16x1xf32>
      %cst_31 = arith.constant 0.000000e+00 : f32
      %57 = vector.broadcast %cst_31 : f32 to vector<16x1xf32>
      %58 = arith.subf %57, %56 : vector<16x1xf32>
      %59 = math.exp %58 : vector<16x1xf32>
      %cst_32 = arith.constant 1.000000e+00 : f32
      %60 = vector.broadcast %cst_32 : f32 to vector<16x1xf32>
      %61 = arith.addf %60, %59 : vector<16x1xf32>
      %cst_33 = arith.constant 1.000000e-01 : f32
      %62 = vector.broadcast %cst_33 : f32 to vector<16x1xf32>
      %63 = arith.divf %62, %61 : vector<16x1xf32>
      %64 = vector.broadcast %63 : vector<16x1xf32> to vector<16x128xf32>
      %65 = arith.subf %50, %64 : vector<16x128xf32>
      %cst_34 = arith.constant 0.000000e+00 : f32
      %66 = vector.broadcast %cst_34 : f32 to vector<16x128xf32>
      %67 = arith.select %37, %65, %66 : vector<16x128xi1>, vector<16x128xf32>
      %cst_35 = arith.constant 0.000000e+00 : f32
      %68 = vector.broadcast %cst_35 : f32 to vector<16x128xf32>
      %69 = arith.cmpf oge, %67, %68 : vector<16x128xf32>
      %70 = arith.extui %69 : vector<16x128xi1> to vector<16x128xi32>
      %71 = arith.sitofp %70 : vector<16x128xi32> to vector<16x128xf32>
      %cst_36 = arith.constant 0.000000e+00 : f32
      %72 = vector.broadcast %cst_36 : f32 to vector<16x128xf32>
      %73 = arith.select %37, %71, %72 : vector<16x128xi1>, vector<16x128xf32>
      %74 = arith.mulf %67, %73 : vector<16x128xf32>
      %cst_37 = arith.constant dense<0.000000e+00> : vector<16xf32>
      %75 = vector.multi_reduction <add>, %74, %cst_37 [1] : vector<16x128xf32> to vector<16xf32>
      %76 = vector.shape_cast %75 : vector<16xf32> to vector<16x1xf32>
      %cst_38 = arith.constant 0.000000e+00 : f32
      %77 = vector.broadcast %cst_38 : f32 to vector<16x1xf32>
      %78 = arith.cmpf oeq, %76, %77 : vector<16x1xf32>
      %cst_39 = arith.constant 1.000000e+00 : f32
      %79 = vector.broadcast %cst_39 : f32 to vector<16x1xf32>
      %80 = arith.select %78, %79, %76 : vector<16x1xi1>, vector<16x1xf32>
      %81 = vector.broadcast %80 : vector<16x1xf32> to vector<16x128xf32>
      %82 = arith.divf %74, %81 : vector<16x128xf32>
      %83 = tpu.iota {dimensions = array<i32: 0>} : vector<16x1xi32>
      %84 = vector.broadcast %0 : i32 to vector<16x1xi32>
      %85 = arith.addi %83, %84 : vector<16x1xi32>
      %c16_i32_40 = arith.constant 16 : i32
      %86 = vector.broadcast %c16_i32_40 : i32 to vector<16x1xi32>
      %87 = arith.cmpi slt, %85, %86 : vector<16x1xi32>
      %88 = arith.extui %87 : vector<16x1xi1> to vector<16x1xi32>
      %89 = arith.sitofp %88 : vector<16x1xi32> to vector<16x1xf32>
      %90 = vector.broadcast %89 : vector<16x1xf32> to vector<16x128xf32>
      %91 = arith.mulf %82, %90 : vector<16x128xf32>
      %c0_41 = arith.constant 0 : index
      %c0_42 = arith.constant 0 : index
      %92 = vector.load %arg11[%c0_41, %c0_42] : memref<16x128xf32, #tpu.memory_space<vmem>>, vector<16x128xf32>
      tpu.vector_store %arg11[%c0_41, %c0_42], %91 {strides = array<i32>} : memref<16x128xf32, #tpu.memory_space<vmem>>, vector<16x128xf32>,
      %93 = vector.broadcast %89 : vector<16x1xf32> to vector<16x128xf32>
      %94 = arith.mulf %67, %93 : vector<16x128xf32>
      %cst_43 = arith.constant dense<0.000000e+00> : vector<128xf32>
      %95 = vector.multi_reduction <add>, %94, %cst_43 [0] : vector<16x128xf32> to vector<128xf32>
      %96 = vector.shape_cast %95 : vector<128xf32> to vector<1x128xf32>
      %97 = vector.broadcast %89 : vector<16x1xf32> to vector<16x128xf32>
      %98 = arith.mulf %73, %97 : vector<16x128xf32>
      %cst_44 = arith.constant dense<0.000000e+00> : vector<128xf32>
      %99 = vector.multi_reduction <add>, %98, %cst_44 [0] : vector<16x128xf32> to vector<128xf32>
      %100 = vector.shape_cast %99 : vector<128xf32> to vector<1x128xf32>
      %101 = tpu.iota {dimensions = array<i32: 0>} : vector<8x128xi32>
      %c0_i32_45 = arith.constant 0 : i32
      %102 = vector.broadcast %c0_i32_45 : i32 to vector<8x128xi32>
      %103 = arith.cmpi eq, %101, %102 : vector<8x128xi32>
      %104 = vector.shape_cast %96 : vector<1x128xf32> to vector<1x128xf32>
      %105 = vector.broadcast %104 : vector<1x128xf32> to vector<8x128xf32>
      %c1_i32 = arith.constant 1 : i32
      %106 = vector.broadcast %c1_i32 : i32 to vector<8x128xi32>
      %107 = arith.cmpi eq, %101, %106 : vector<8x128xi32>
      %108 = vector.shape_cast %100 : vector<1x128xf32> to vector<1x128xf32>
      %109 = vector.broadcast %108 : vector<1x128xf32> to vector<8x128xf32>
      %cst_46 = arith.constant 0.000000e+00 : f32
      %110 = vector.broadcast %cst_46 : f32 to vector<8x128xf32>
      %111 = arith.select %107, %109, %110 : vector<8x128xi1>, vector<8x128xf32>
      %112 = arith.select %103, %105, %111 : vector<8x128xi1>, vector<8x128xf32>
      %c0_47 = arith.constant 0 : index
      %c0_48 = arith.constant 0 : index
      %c0_49 = arith.constant 0 : index
      %113 = vector.load %arg9[%c0_47, %c0_48, %c0_49] : memref<1x8x128xf32, #tpu.memory_space<vmem>>, vector<1x8x128xf32>
      %114 = vector.shape_cast %113 : vector<1x8x128xf32> to vector<8x128xf32>
      %115 = vector.shape_cast %112 : vector<8x128xf32> to vector<1x8x128xf32>
      tpu.vector_store %arg9[%c0_47, %c0_48, %c0_49], %115 {strides = array<i32>} : memref<1x8x128xf32, #tpu.memory_space<vmem>>, vector<1x8x128xf32>,
    } else {
    }
    %c0_i32_2 = arith.constant 0 : i32
    %6 = arith.cmpi eq, %arg2, %c0_i32_2 : i32
    %7 = arith.extui %6 : i1 to i32
    %c0_i32_3 = arith.constant 0 : i32
    %8 = arith.cmpi ne, %7, %c0_i32_3 : i32
    scf.if %8 {
      %cst_17 = arith.constant 0.000000e+00 : f32
      %29 = vector.broadcast %cst_17 : f32 to vector<16x128xf32>
      %c0_18 = arith.constant 0 : index
      %c0_19 = arith.constant 0 : index
      %30 = vector.load %arg10[%c0_18, %c0_19] : memref<16x128xf32, #tpu.memory_space<vmem>>, vector<16x128xf32>
      tpu.vector_store %arg10[%c0_18, %c0_19], %29 {strides = array<i32>} : memref<16x128xf32, #tpu.memory_space<vmem>>, vector<16x128xf32>,
    } else {
    }
    %9 = tpu.iota {dimensions = array<i32: 1>} : vector<16x128xi32>
    %10 = vector.broadcast %arg2 : i32 to vector<16x128xi32>
    %11 = arith.cmpi eq, %9, %10 : vector<16x128xi32>
    %c0 = arith.constant 0 : index
    %c0_4 = arith.constant 0 : index
    %12 = vector.load %arg11[%c0, %c0_4] : memref<16x128xf32, #tpu.memory_space<vmem>>, vector<16x128xf32>
    %cst = arith.constant 0.000000e+00 : f32
    %13 = vector.broadcast %cst : f32 to vector<16x128xf32>
    %14 = arith.select %11, %12, %13 : vector<16x128xi1>, vector<16x128xf32>
    %cst_5 = arith.constant dense<0.000000e+00> : vector<16xf32>
    %15 = vector.multi_reduction <add>, %14, %cst_5 [1] : vector<16x128xf32> to vector<16xf32>
    %16 = vector.shape_cast %15 : vector<16xf32> to vector<16x1xf32>
    %c0_6 = arith.constant 0 : index
    %c0_7 = arith.constant 0 : index
    %17 = vector.load %arg10[%c0_6, %c0_7] : memref<16x128xf32, #tpu.memory_space<vmem>>, vector<16x128xf32>
    %c0_8 = arith.constant 0 : index
    %c0_9 = arith.constant 0 : index
    %18 = vector.load %arg3[%c0_8, %c0_9] : memref<16x32xbf16, #tpu.memory_space<vmem>>, vector<16x32xbf16>
    %c0_10 = arith.constant 0 : index
    %c0_11 = arith.constant 0 : index
    %c0_12 = arith.constant 0 : index
    %19 = vector.load %arg6[%c0_10, %c0_11, %c0_12] : memref<1x32x128xbf16, #tpu.memory_space<vmem>>, vector<1x32x128xbf16>
    %20 = vector.shape_cast %19 : vector<1x32x128xbf16> to vector<32x128xbf16>
    %cst_13 = arith.constant dense<0.000000e+00> : vector<16x128xf32>
    %21 = tpu.matmul %18, %20, %cst_13 {dimension_numbers = #tpu.dot_dimension_numbers<[1], [0], [0], [1], [0, 0, 1, 1], [], []>} : vector<16x32xbf16>, vector<32x128xbf16>, vector<16x128xf32> -> vector<16x128xf32>
    %22 = vector.broadcast %16 : vector<16x1xf32> to vector<16x128xf32>
    %23 = arith.mulf %22, %21 : vector<16x128xf32>
    %24 = arith.addf %17, %23 : vector<16x128xf32>
    %c0_14 = arith.constant 0 : index
    %c0_15 = arith.constant 0 : index
    %25 = vector.load %arg10[%c0_14, %c0_15] : memref<16x128xf32, #tpu.memory_space<vmem>>, vector<16x128xf32>
    tpu.vector_store %arg10[%c0_14, %c0_15], %24 {strides = array<i32>} : memref<16x128xf32, #tpu.memory_space<vmem>>, vector<16x128xf32>,
    %c7_i32 = arith.constant 7 : i32
    %26 = arith.cmpi eq, %arg2, %c7_i32 : i32
    %27 = arith.extui %26 : i1 to i32
    %c0_i32_16 = arith.constant 0 : i32
    %28 = arith.cmpi ne, %27, %c0_i32_16 : i32
    scf.if %28 {
      %c0_17 = arith.constant 0 : index
      %c0_18 = arith.constant 0 : index
      %29 = vector.load %arg10[%c0_17, %c0_18] : memref<16x128xf32, #tpu.memory_space<vmem>>, vector<16x128xf32>
      %c0_19 = arith.constant 0 : index
      %c0_20 = arith.constant 0 : index
      %30 = vector.load %arg11[%c0_19, %c0_20] : memref<16x128xf32, #tpu.memory_space<vmem>>, vector<16x128xf32>
      %c0_21 = arith.constant 0 : index
      %c0_22 = arith.constant 0 : index
      %31 = vector.load %arg7[%c0_21, %c0_22] : memref<128x128xf32, #tpu.memory_space<vmem>>, vector<128x128xf32>
      %cst_23 = arith.constant dense<0.000000e+00> : vector<16x128xf32>
      %32 = tpu.matmul %30, %31, %cst_23 {dimension_numbers = #tpu.dot_dimension_numbers<[1], [0], [0], [1], [0, 0, 1, 1], [], []>} : vector<16x128xf32>, vector<128x128xf32>, vector<16x128xf32> -> vector<16x128xf32>
      %33 = arith.addf %29, %32 : vector<16x128xf32>
      %34 = arith.truncf %33 : vector<16x128xf32> to vector<16x128xbf16>
      %c0_24 = arith.constant 0 : index
      %c0_25 = arith.constant 0 : index
      %35 = vector.load %arg8[%c0_24, %c0_25] : memref<16x128xbf16, #tpu.memory_space<vmem>>, vector<16x128xbf16>
      tpu.vector_store %arg8[%c0_24, %c0_25], %34 {strides = array<i32>} : memref<16x128xbf16, #tpu.memory_space<vmem>>, vector<16x128xbf16>,
    } else {
    }
    return
  }
  func.func @transform_0(%arg0: i32, %arg1: i32, %arg2: i32) -> (i32, i32) {
    %c0_i32 = arith.constant 0 : i32
    %c0_i32_0 = arith.constant 0 : i32
    return %arg0, %c0_i32 : i32, i32
  }
  func.func @transform_1(%arg0: i32, %arg1: i32, %arg2: i32) -> (i32, i32) {
    %c0_i32 = arith.constant 0 : i32
    %c0_i32_0 = arith.constant 0 : i32
    %c0_i32_1 = arith.constant 0 : i32
    return %c0_i32, %c0_i32_0 : i32, i32
  }
  func.func @transform_2(%arg0: i32, %arg1: i32, %arg2: i32) -> (i32, i32) {
    %c0_i32 = arith.constant 0 : i32
    %c0_i32_0 = arith.constant 0 : i32
    %c0_i32_1 = arith.constant 0 : i32
    return %c0_i32, %c0_i32_0 : i32, i32
  }
  func.func @transform_3(%arg0: i32, %arg1: i32, %arg2: i32) -> (i32, i32, i32) {
    %c0_i32 = arith.constant 0 : i32
    %c0_i32_0 = arith.constant 0 : i32
    return %arg2, %c0_i32, %arg1 : i32, i32, i32
  }
  func.func @transform_4(%arg0: i32, %arg1: i32, %arg2: i32) -> (i32, i32) {
    %c0_i32 = arith.constant 0 : i32
    %c0_i32_0 = arith.constant 0 : i32
    return %c0_i32, %arg1 : i32, i32
  }
  func.func @transform_5(%arg0: i32, %arg1: i32, %arg2: i32) -> (i32, i32) {
    %c0_i32 = arith.constant 0 : i32
    return %arg0, %arg1 : i32, i32
  }
  func.func @transform_6(%arg0: i32, %arg1: i32, %arg2: i32) -> (i32, i32, i32) {
    %c0_i32 = arith.constant 0 : i32
    %c0_i32_0 = arith.constant 0 : i32
    %c0_i32_1 = arith.constant 0 : i32
    return %arg0, %c0_i32, %c0_i32_0 : i32, i32, i32
  }
}

</mosaic_0001>

<llo_original>
// kernel: tpu_custom_call.1
$region0: #{tpu_custom_call.1}
  #allocation0 [shape = 'u32[]', space=smem, size = 0x4, offset = 0x4, fixed_abs, tag = 'smem constant byte address 0x4 - core index']
  #allocation1 [shape = 'u32[144,128]{1,0:T(1,128)}', space=vmem, size = 0x12000, scoped, tag = 'internal scratch']
  #allocation2 [shape = 'f32[16,128]{1,0:T(8,128)}', space=vmem, size = 0x2000, scoped, tag = 'scratch operand']
  #allocation3 [shape = 'f32[16,128]{1,0:T(8,128)}', space=vmem, size = 0x2000, scoped, tag = 'scratch operand']
  %s0 = inlined_call_operand.hbm [shape: bf16[16,32], index: 0, kind: input, shape index: {}]
  %s1 = inlined_call_operand.hbm [shape: bf16[32,128], index: 1, kind: input, shape index: {}]
  %s2 = inlined_call_operand.vmem [shape: f32[1,128], index: 2, kind: input, shape index: {}]
  %s3 = inlined_call_operand.hbm [shape: bf16[8,32,128], index: 3, kind: input, shape index: {}]
  %s4 = inlined_call_operand.hbm [shape: f32[128,128], index: 4, kind: input, shape index: {}]
  %s5 = inlined_call_operand.hbm [shape: bf16[16,128], index: 5, kind: output, shape index: {0}]
  %s6 = inlined_call_operand.hbm [shape: f32[1,8,128], index: 6, kind: output, shape index: {1}]
  %7 = xla_tuple %s5, %s6
  %s8 = sld [smem:[#allocation0]]
  $region89: #{tpu_custom_call.1} parent=0
    _
  %s10 = ssub.s32 1, %s8
  %s11 = scalar_select 0, %s10, %s8
  $region1: #{tpu_custom_call.1} parent=0
    #allocation4 [shape = 'u8[4096]{0}', space=vmem, size = 0x1000, scoped, tag = 'input window, operand 0, single buffered']
    #allocation5 [shape = 's32[2]{0}', space=sflag, size = 0x8, scoped, tag = 'scoped memory for tpu_custom_call.1']
    #allocation6 [shape = 's32[2]{0}', space=sflag, size = 0x8, scoped, tag = 'scoped memory for tpu_custom_call.1']
    #allocation7 [shape = 'u8[8192]{0}', space=vmem, size = 0x2000, scoped, tag = 'input window, operand 1, single buffered']
    #allocation8 [shape = 's32[1]{0}', space=sflag, size = 0x4, scoped, tag = 'scoped memory for tpu_custom_call.1']
    #allocation9 [shape = 'u8[16384]{0}', space=vmem, size = 0x4000, scoped, tag = 'input window, operand 3']
    #allocation10 [shape = 'u8[65536]{0}', space=vmem, size = 0x10000, scoped, tag = 'input window, operand 4, single buffered']
    #allocation11 [shape = 'u8[4096]{0}', space=vmem, size = 0x1000, scoped, tag = 'output window, operand 0, single buffered']
    #allocation12 [shape = 'u8[4096]{0}', space=vmem, size = 0x1000, scoped, tag = 'output window, operand 1, single buffered']
    #allocation13 [shape = 's32[1]{0}', space=sflag, size = 0x4, scoped, tag = 'scoped memory for tpu_custom_call.1']
    %12 = vsyncpa [#allocation5], 0
    %13 = vsyncpa [#allocation8], 0
    %14 = vsyncpa [#allocation6], 0
    %15 = vsyncpa [#allocation13], 0
    loop: start=0, step=1, limit=10
    $region2: #{tpu_custom_call.1} parent=1 // loop_pre_header
      _
    $region3: #{tpu_custom_call.1} parent=1 // loop_header
      %s17 = sphi 0, %s21
      %p18 = scmp.ge.s32.totalorder %s17, 10
      %s24 = sphi 0, %s43
      %s25 = sphi 0, %s39
      %s26 = sphi 0, %s35
      %s27 = sphi 0, %s24
      %s28 = sphi 0, %s25
      %s29 = sphi 0, %s26
      %s30 = sphi 0, %s27
      %s31 = sphi 0, %s28
      %s32 = sphi 0, %s29
      %s46 = sphi 0, %s48
      %s49 = sphi 0, %s46
      %s50 = sphi 0, %s49
      %s66 = sphi 0, %s50
      %s70 = sphi 0, %s70
      %s72 = sphi 0, %s70
      %s73 = sphi 0, %s72
      %s87 = sphi 0, %s73
      %s91 = sphi 0, %s91
      %s93 = sphi 0, %s91
      %s94 = sphi 0, %s93
      %s108 = sphi 0, %s94
      %s116 = sphi 0, %s118
      %s119 = sphi 0, %s116
      %s120 = sphi 0, %s119
      %s136 = sphi 0, %s120
      %s142 = sphi 0, %s144
      %s145 = sphi 0, %s142
      %s146 = sphi 0, %s145
      %s162 = sphi 0, %s146
      %s170 = sphi 0, %s172
      %s173 = sphi 0, %s170
      %s174 = sphi 0, %s173
      %s190 = sphi 0, %s174
      %s196 = sphi 0, %s198
      %s199 = sphi 0, %s196
      %s200 = sphi 0, %s199
      %s216 = sphi 0, %s200
    $region4: #{tpu_custom_call.1} parent=1 // loop_header_branch
      %20 = sbr.rel (%p18) target = $region8
    $region5: #{tpu_custom_call.1} parent=1 // loop_body
      %s22 = ssub.s32 %s17, 1
      %s23 = ssub.s32 %s17, 2
      %s33 = sadd.s32 1, %s26
      %p34 = scmp.ge.s32.totalorder %s33, 8
      %s35 = scalar_select %p34, 0, %s33
      %s36 = sadd.s32 1, %s25
      %s37 = scalar_select %p34, %s36, %s25
      %p38 = scmp.ge.s32.totalorder %s37, 1
      %s39 = scalar_select %p38, 0, %s37
      %s40 = sadd.s32 1, %s24
      %s41 = scalar_select %p38, %s40, %s24
      %p42 = scmp.ge.s32.totalorder %s41, 1
      %s43 = scalar_select %p42, 0, %s41
      %s44 = ssub.s32 %s24, %s43
      %p45 = scmp.eq.s32.totalorder %s44, 0
      %s47 = sadd.s32 %s46, 1
      %s48 = scalar_select %p45, %s46, %s47
      %p51 = pneg %p45
      %p52 = scmp.eq.s32.totalorder %s17, 7
      %p53 = por %p51, %p52
      %p54 = scmp.ne.s32.totalorder %s46, %s49
      %p55 = scmp.eq.s32.totalorder %s17, 0
      %p56 = por %p54, %p55
      %p57 = scmp.ne.s32.totalorder %s46, %s49
      %p58 = scmp.eq.s32.totalorder %s22, 7
      %p59 = por %p57, %p58
      %p60 = scmp.ne.s32.totalorder %s49, %s50
      %p61 = scmp.eq.s32.totalorder %s22, 0
      %p62 = por %p60, %p61
      %p63 = scmp.ne.s32.totalorder %s49, %s50
      %p64 = scmp.eq.s32.totalorder %s23, 7
      %p65 = por %p63, %p64
      %p67 = scmp.ne.s32.totalorder %s50, %s66
      %p68 = scmp.eq.s32.totalorder %s23, 0
      %p69 = por %p67, %p68
      %s71 = sadd.s32 %s70, 1
      %p74 = scmp.eq.s32.totalorder %s17, 7
      %p75 = scmp.ne.s32.totalorder %s70, %s72
      %p76 = scmp.eq.s32.totalorder %s17, 0
      %p77 = por %p75, %p76
      %p78 = scmp.ne.s32.totalorder %s70, %s72
      %p79 = scmp.eq.s32.totalorder %s22, 7
      %p80 = por %p78, %p79
      %p81 = scmp.ne.s32.totalorder %s72, %s73
      %p82 = scmp.eq.s32.totalorder %s22, 0
      %p83 = por %p81, %p82
      %p84 = scmp.ne.s32.totalorder %s72, %s73
      %p85 = scmp.eq.s32.totalorder %s23, 7
      %p86 = por %p84, %p85
      %p88 = scmp.ne.s32.totalorder %s73, %s87
      %p89 = scmp.eq.s32.totalorder %s23, 0
      %p90 = por %p88, %p89
      %s92 = sadd.s32 %s91, 1
      %p95 = scmp.eq.s32.totalorder %s17, 7
      %p96 = scmp.ne.s32.totalorder %s91, %s93
      %p97 = scmp.eq.s32.totalorder %s17, 0
      %p98 = por %p96, %p97
      %p99 = scmp.ne.s32.totalorder %s91, %s93
      %p100 = scmp.eq.s32.totalorder %s22, 7
      %p101 = por %p99, %p100
      %p102 = scmp.ne.s32.totalorder %s93, %s94
      %p103 = scmp.eq.s32.totalorder %s22, 0
      %p104 = por %p102, %p103
      %p105 = scmp.ne.s32.totalorder %s93, %s94
      %p106 = scmp.eq.s32.totalorder %s23, 7
      %p107 = por %p105, %p106
      %p109 = scmp.ne.s32.totalorder %s94, %s108
      %p110 = scmp.eq.s32.totalorder %s23, 0
      %p111 = por %p109, %p110
      %s112 = ssub.s32 %s26, %s35
      %s113 = ssub.s32 %s25, %s39
      %s114 = sor.u32 %s112, %s113
      %p115 = scmp.eq.s32.totalorder %s114, 0
      %s117 = sadd.s32 %s116, 1
      %s118 = scalar_select %p115, %s116, %s117
      %p121 = pneg %p115
      %p122 = scmp.eq.s32.totalorder %s17, 7
      %p123 = por %p121, %p122
      %p124 = scmp.ne.s32.totalorder %s116, %s119
      %p125 = scmp.eq.s32.totalorder %s17, 0
      %p126 = por %p124, %p125
      %p127 = scmp.ne.s32.totalorder %s116, %s119
      %p128 = scmp.eq.s32.totalorder %s22, 7
      %p129 = por %p127, %p128
      %p130 = scmp.ne.s32.totalorder %s119, %s120
      %p131 = scmp.eq.s32.totalorder %s22, 0
      %p132 = por %p130, %p131
      %p133 = scmp.ne.s32.totalorder %s119, %s120
      %p134 = scmp.eq.s32.totalorder %s23, 7
      %p135 = por %p133, %p134
      %p137 = scmp.ne.s32.totalorder %s120, %s136
      %p138 = scmp.eq.s32.totalorder %s23, 0
      %p139 = por %p137, %p138
      %s140 = ssub.s32 %s25, %s39
      %p141 = scmp.eq.s32.totalorder %s140, 0
      %s143 = sadd.s32 %s142, 1
      %s144 = scalar_select %p141, %s142, %s143
      %p147 = pneg %p141
      %p148 = scmp.eq.s32.totalorder %s17, 7
      %p149 = por %p147, %p148
      %p150 = scmp.ne.s32.totalorder %s142, %s145
      %p151 = scmp.eq.s32.totalorder %s17, 0
      %p152 = por %p150, %p151
      %p153 = scmp.ne.s32.totalorder %s142, %s145
      %p154 = scmp.eq.s32.totalorder %s22, 7
      %p155 = por %p153, %p154
      %p156 = scmp.ne.s32.totalorder %s145, %s146
      %p157 = scmp.eq.s32.totalorder %s22, 0
      %p158 = por %p156, %p157
      %p159 = scmp.ne.s32.totalorder %s145, %s146
      %p160 = scmp.eq.s32.totalorder %s23, 7
      %p161 = por %p159, %p160
      %p163 = scmp.ne.s32.totalorder %s146, %s162
      %p164 = scmp.eq.s32.totalorder %s23, 0
      %p165 = por %p163, %p164
      %s166 = ssub.s32 %s24, %s43
      %s167 = ssub.s32 %s25, %s39
      %s168 = sor.u32 %s166, %s167
      %p169 = scmp.eq.s32.totalorder %s168, 0
      %s171 = sadd.s32 %s170, 1
      %s172 = scalar_select %p169, %s170, %s171
      %p175 = pneg %p169
      %p176 = scmp.eq.s32.totalorder %s17, 7
      %p177 = por %p175, %p176
      %p178 = scmp.ne.s32.totalorder %s170, %s173
      %p179 = scmp.eq.s32.totalorder %s17, 0
      %p180 = por %p178, %p179
      %p181 = scmp.ne.s32.totalorder %s170, %s173
      %p182 = scmp.eq.s32.totalorder %s22, 7
      %p183 = por %p181, %p182
      %p184 = scmp.ne.s32.totalorder %s173, %s174
      %p185 = scmp.eq.s32.totalorder %s22, 0
      %p186 = por %p184, %p185
      %p187 = scmp.ne.s32.totalorder %s173, %s174
      %p188 = scmp.eq.s32.totalorder %s23, 7
      %p189 = por %p187, %p188
      %p191 = scmp.ne.s32.totalorder %s174, %s190
      %p192 = scmp.eq.s32.totalorder %s23, 0
      %p193 = por %p191, %p192
      %s194 = ssub.s32 %s24, %s43
      %p195 = scmp.eq.s32.totalorder %s194, 0
      %s197 = sadd.s32 %s196, 1
      %s198 = scalar_select %p195, %s196, %s197
      %p201 = pneg %p195
      %p202 = scmp.eq.s32.totalorder %s17, 7
      %p203 = por %p201, %p202
      %p204 = scmp.ne.s32.totalorder %s196, %s199
      %p205 = scmp.eq.s32.totalorder %s17, 0
      %p206 = por %p204, %p205
      %p207 = scmp.ne.s32.totalorder %s196, %s199
      %p208 = scmp.eq.s32.totalorder %s22, 7
      %p209 = por %p207, %p208
      %p210 = scmp.ne.s32.totalorder %s199, %s200
      %p211 = scmp.eq.s32.totalorder %s22, 0
      %p212 = por %p210, %p211
      %p213 = scmp.ne.s32.totalorder %s199, %s200
      %p214 = scmp.eq.s32.totalorder %s23, 7
      %p215 = por %p213, %p214
      %p217 = scmp.ne.s32.totalorder %s200, %s216
      %p218 = scmp.eq.s32.totalorder %s23, 0
      %p219 = por %p217, %p218
      %p220 = scmp.le.s32.totalorder 1, %s17
      %p221 = scmp.lt.s32.totalorder %s17, 9
      %p222 = pnand %p220, %p221
      %p223 = pneg %p222
      // Predicated region
      $region9: #{tpu_custom_call.1} parent=5 // pred_check
        _
      $region10: #{tpu_custom_call.1} parent=5 // pred_check_branch
        %225 = sbr.rel (%p222) target = $region12
      $region11: #{tpu_custom_call.1} parent=5 // pred_region
        %s226 = ssub.s32 %s17, 1
        // Predicated region
        $region13: #{tpu_custom_call.1} parent=11 // pred_check
          %p227 = pneg %p62
        $region14: #{tpu_custom_call.1} parent=11 // pred_check_branch
          %229 = sbr.rel (%p227) target = $region16
        $region15: #{tpu_custom_call.1} parent=11 // pred_region
          %s230 = smul.u32 2, %s27
          %s232 = ssub.s32 128, 128
          %233 = vsyncadd [#allocation5], %s232
          %s234 = smul.addr %s230, 64
          %s235 = scalar_lea.hbm %s0, %s234
          %s236 = sshll.u32 [#allocation4], 4
          %s237 = int_to_ptr.vmem [resolvable:$true] %s236
          %242 = dma.hbm_to_vmem [thread:$0]  %s235, 128, %s237, [#allocation5], 64, 64, 4
        $region16: #{tpu_custom_call.1} parent=11 // pred_fallthru
          _
        // Predicated region
        $region17: #{tpu_custom_call.1} parent=11 // pred_check
          %p243 = pneg %p83
        $region18: #{tpu_custom_call.1} parent=11 // pred_check_branch
          %245 = sbr.rel (%p243) target = $region20
        $region19: #{tpu_custom_call.1} parent=11 // pred_region
          %s247 = ssub.s32 256, 256
          %248 = vsyncadd [#allocation8], %s247
          %s249 = sshll.u32 [#allocation7], 4
          %s250 = int_to_ptr.vmem [resolvable:$true] %s249
          %255 = dma.hbm_to_vmem [thread:$0]  %s1, 256, %s250, [#allocation8], 64, 64, 4
        $region20: #{tpu_custom_call.1} parent=11 // pred_fallthru
          _
        // Predicated region
        $region21: #{tpu_custom_call.1} parent=11 // pred_check
          %p256 = pneg %p104
        $region22: #{tpu_custom_call.1} parent=11 // pred_check_branch
          %258 = sbr.rel (%p256) target = $region24
        $region23: #{tpu_custom_call.1} parent=11 // pred_region
          _
        $region24: #{tpu_custom_call.1} parent=11 // pred_fallthru
          _
        // Predicated region
        $region25: #{tpu_custom_call.1} parent=11 // pred_check
          %p259 = pneg %p158
        $region26: #{tpu_custom_call.1} parent=11 // pred_check_branch
          %261 = sbr.rel (%p259) target = $region28
        $region27: #{tpu_custom_call.1} parent=11 // pred_region
          %s263 = ssub.s32 2048, 2048
          %264 = vsyncadd [#allocation8], %s263
          %s265 = smul.addr %s28, 128
          %s266 = scalar_lea.hbm %s4, %s265
          %s267 = sshll.u32 [#allocation10], 4
          %s268 = int_to_ptr.vmem [resolvable:$true] %s267
          %273 = dma.hbm_to_vmem [thread:$0]  %s266, 2048, %s268, [#allocation8], 128, 128, 8
        $region28: #{tpu_custom_call.1} parent=11 // pred_fallthru
          _
      $region12: #{tpu_custom_call.1} parent=5 // pred_fallthru
        _
      %p274 = scmp.lt.s32.totalorder %s17, 8
      // Predicated region
      $region29: #{tpu_custom_call.1} parent=5 // pred_check
        %p275 = pneg %p274
      $region30: #{tpu_custom_call.1} parent=5 // pred_check_branch
        %277 = sbr.rel (%p275) target = $region32
      $region31: #{tpu_custom_call.1} parent=5 // pred_region
        // Predicated region
        $region33: #{tpu_custom_call.1} parent=31 // pred_check
          %p278 = pneg %p126
        $region34: #{tpu_custom_call.1} parent=31 // pred_check_branch
          %280 = sbr.rel (%p278) target = $region36
        $region35: #{tpu_custom_call.1} parent=31 // pred_region
          %s281 = sand.u32 %s17, 1
          %s282 = scalar_lea.sflag [#allocation5], %s281
          %s283 = sand.u32 %s116, 1
          %s284 = smul.addr %s283, 16
          %s285 = scalar_lea.vmem [#allocation9], %s284
          %s287 = ssub.s32 256, 256
          %288 = vsyncadd %s282, %s287
          %s289 = smul.addr %s26, 4
          %s290 = sadd.s32 %s25, %s289
          %s291 = smul.addr %s290, 64
          %s292 = scalar_lea.hbm %s3, %s291
          %s293 = sshll.u32 %s285, 4
          %s294 = int_to_ptr.vmem [resolvable:$true] %s293
          %299 = dma.hbm_to_vmem [thread:$0]  %s292, 256, %s294, %s282, 64, 64, 4
        $region36: #{tpu_custom_call.1} parent=31 // pred_fallthru
          _
      $region32: #{tpu_custom_call.1} parent=5 // pred_fallthru
        _
      %p300 = scmp.le.s32.totalorder 1, %s17
      %p301 = scmp.lt.s32.totalorder %s17, 9
      %p302 = pnand %p300, %p301
      %p303 = pneg %p302
      // Predicated region
      $region37: #{tpu_custom_call.1} parent=5 // pred_check
        _
      $region38: #{tpu_custom_call.1} parent=5 // pred_check_branch
        %305 = sbr.rel (%p302) target = $region40
      $region39: #{tpu_custom_call.1} parent=5 // pred_region
        %s306 = ssub.s32 %s17, 1
        // Predicated region
        $region41: #{tpu_custom_call.1} parent=39 // pred_check
          %p307 = pneg %p62
        $region42: #{tpu_custom_call.1} parent=39 // pred_check_branch
          %309 = sbr.rel (%p307) target = $region44
        $region43: #{tpu_custom_call.1} parent=39 // pred_region
          %310 = dma.done [#allocation5], 128
        $region44: #{tpu_custom_call.1} parent=39 // pred_fallthru
          _
        // Predicated region
        $region45: #{tpu_custom_call.1} parent=39 // pred_check
          %p311 = pneg %p83
        $region46: #{tpu_custom_call.1} parent=39 // pred_check_branch
          %313 = sbr.rel (%p311) target = $region48
        $region47: #{tpu_custom_call.1} parent=39 // pred_region
          %314 = dma.done [#allocation8], 256
        $region48: #{tpu_custom_call.1} parent=39 // pred_fallthru
          _
        %s315 = sand.u32 %s22, 1
        %s316 = scalar_lea.sflag [#allocation5], %s315
        %s317 = sand.u32 %s119, 1
        %s318 = smul.addr %s317, 16
        %s319 = scalar_lea.vmem [#allocation9], %s318
        // Predicated region
        $region49: #{tpu_custom_call.1} parent=39 // pred_check
          %p320 = pneg %p132
        $region50: #{tpu_custom_call.1} parent=39 // pred_check_branch
          %322 = sbr.rel (%p320) target = $region52
        $region51: #{tpu_custom_call.1} parent=39 // pred_region
          %323 = dma.done %s316, 256
        $region52: #{tpu_custom_call.1} parent=39 // pred_fallthru
          _
        // Predicated region
        $region53: #{tpu_custom_call.1} parent=39 // pred_check
          %p324 = pneg %p158
        $region54: #{tpu_custom_call.1} parent=39 // pred_check_branch
          %326 = sbr.rel (%p324) target = $region56
        $region55: #{tpu_custom_call.1} parent=39 // pred_region
          %327 = dma.done [#allocation8], 2048
        $region56: #{tpu_custom_call.1} parent=39 // pred_fallthru
          _
        %p328 = pneg %p62
        %p329 = pneg %p59
        %p330 = pneg %p83
        %p331 = pneg %p80
        %p332 = pneg %p104
        %p333 = pneg %p101
        %s334 = sand.u32 %s22, 1
        %s335 = scalar_lea.sflag [#allocation5], %s334
        %s336 = sand.u32 %s119, 1
        %s337 = smul.addr %s336, 16
        %s338 = scalar_lea.vmem [#allocation9], %s337
        %p339 = pneg %p132
        %p340 = pneg %p129
        %p341 = pneg %p158
        %p342 = pneg %p155
        %p343 = pneg %p186
        %p344 = pneg %p183
        %p345 = pneg %p212
        %p346 = pneg %p209
        %s347 = smul.u32 2, %s27
        %s348 = smul.u32 2, %s27
        %s350 = smul.u32 %s27, 16
        %p351 = scmp.eq.s32.totalorder %s28, 0
        %p352 = scmp.eq.s32.totalorder %s29, 0
        %p353 = pnand %p351, %p352
        %p354 = pneg %p353
        // Predicated region
        $region57: #{tpu_custom_call.1} parent=39 // pred_check
          _
        $region58: #{tpu_custom_call.1} parent=39 // pred_check_branch
          %356 = sbr.rel (%p353) target = $region60
        $region59: #{tpu_custom_call.1} parent=39 // pred_region
          %v357 = vld [vmem:[#allocation4] sm:$0xf]
          %v358 = vld [vmem:[#allocation4 + $0x4] sm:$0xf]
          %v359 = vld [vmem:[#allocation7] sm:$0xf]
          %v360 = vld [vmem:[#allocation7 + $0x4] sm:$0xf]
          %v361 = vld [vmem:[#allocation7 + $0x8] sm:$0xf]
          %v362 = vld [vmem:[#allocation7 + $0xc] sm:$0xf]
          %v363 = vld [vmem:[%s2] sm:$0x1]
          %v365 = vlaneseq
          %v366 = vshrl.u32 %v365, 7
          %v367 = vsub.s32 0, %v366
          %v368 = vrot.slane %v363, %v367
          %v372 = vunpack.c.l.b16 %v357
          %v373 = vunpack.c.l.b16 %v358
          %v374 = vpack.c.b16 %v373, %v372
          %v379 = vunpack.c.l.b16 %v359
          %v380 = vunpack.c.l.b16 %v360
          %v381 = vunpack.c.l.b16 %v361
          %v382 = vunpack.c.l.b16 %v362
          %v383 = vpack.c.b16 %v380, %v379
          %v384 = vpack.c.b16 %v382, %v381
          %vm387 = vcmask 261120
          %v389 = vsel %vm387, %v374, 0
          %391 = vmatprep.subr.bf16.mxu0 0
          %392 = vmatpush1.bf16.msra.mxu0 %v383
          %393 = vmatprep.subr.bf16.mxu0 0
          %394 = vmatpush1.bf16.msra.mxu0 %v384
          %395 = vmatprep.subr.bf16.mxu0 0
          %396 = vmatpush1.bf16.msra.mxu0 0
          %397 = vmatprep.subr.bf16.mxu0 0
          %398 = vmatpush1.bf16.msra.mxu0 0
          %399 = vmatprep.subr.bf16.mxu0 0
          %400 = vmatpush1.bf16.msra.mxu0 0
          %401 = vmatprep.subr.bf16.mxu0 0
          %402 = vmatpush1.bf16.msra.mxu0 0
          %403 = vmatprep.subr.bf16.mxu0 0
          %404 = vmatpush1.bf16.msra.mxu0 0
          %405 = vmatprep.subr.bf16.mxu0 0
          %406 = vmatpush1.bf16.msra.mxu0 0
          %407 = vmatprep.subr.bf16.mxu0 0
          %408 = vmatpush1.bf16.msra.mxu0 0
          %409 = vmatprep.subr.bf16.mxu0 0
          %410 = vmatpush1.bf16.msra.mxu0 0
          %411 = vmatprep.subr.bf16.mxu0 0
          %412 = vmatpush1.bf16.msra.mxu0 0
          %413 = vmatprep.subr.bf16.mxu0 0
          %414 = vmatpush1.bf16.msra.mxu0 0
          %415 = vmatprep.subr.bf16.mxu0 0
          %416 = vmatpush1.bf16.msra.mxu0 0
          %417 = vmatprep.subr.bf16.mxu0 0
          %418 = vmatpush1.bf16.msra.mxu0 0
          %419 = vmatprep.subr.bf16.mxu0 0
          %420 = vmatpush1.bf16.msra.mxu0 0
          %421 = vmatprep.subr.bf16.mxu0 0
          %422 = vmatpush1.bf16.msra.mxu0 0
          %423 = vmatprep.mubr.bf16.mxu0 0
          %424 = vmatmul.mubr.bf16.gmra.mrb[0].mxu0 %v389
          %v425 = vpop.f32.mrb[0].mxu0
          %v426 = vadd.f32 %v368, %v425
          %v427 = vpop.f32.mrb[0].mxu0
          %v428 = vpop.f32.mrb[0].mxu0
          %v429 = vadd.f32 %v368, %v428
          %v430 = vpop.f32.mrb[0].mxu0
          %431 = vdwg.mxu0
          %v432 = vlaneseq
          %v433 = vand.u32 %v432, 127
          %vm434 = vcmp.lt.s32.totalorder %v433, 8
          %v435 = vsel %vm434, %v426, -1e+30
          %v436 = vsel %vm434, %v429, -1e+30
          %437 = vmax.xlane.f32.xlu0 %v435
          %v438 = vpop.xlane.xlu0 %437
          %439 = vmax.xlane.f32.xlu0 %v436
          %v440 = vpop.xlane.xlu0 %439
          %v441 = vsub.f32 %v435, %v438
          %v442 = vsub.f32 %v436, %v440
          %v443 = vmul.f32 %v441, 1.442695
          %v444 = vpow.pop %v443
          %v445 = vmul.f32 %v442, 1.442695
          %v446 = vpow.pop %v445
          %v447 = vsel %vm434, %v444, 0.0
          %v448 = vsel %vm434, %v446, 0.0
          %449 = vadd.xlane.f32.xlu0 %v447
          %v450 = vpop.xlane.xlu0 %449
          %451 = vadd.xlane.f32.xlu0 %v448
          %v452 = vpop.xlane.xlu0 %451
          %v453 = vrcp.pop %v450
          %v454 = vmul.f32 %v447, %v453
          %v455 = vrcp.pop %v452
          %v456 = vmul.f32 %v448, %v455
          %vm457 = vcmp.eq.s32.totalorder %v433, 8
          %v458 = vsel %vm457, %v426, 0.0
          %v459 = vsel %vm457, %v429, 0.0
          %460 = vadd.xlane.f32.xlu0 %v458
          %v461 = vpop.xlane.xlu0 %460
          %462 = vadd.xlane.f32.xlu0 %v459
          %v463 = vpop.xlane.xlu0 %462
          %v464 = vsub.f32 0.0, %v461
          %v465 = vsub.f32 0.0, %v463
          %v466 = vmul.f32 %v464, 1.442695
          %v467 = vpow.pop %v466
          %v468 = vmul.f32 %v465, 1.442695
          %v469 = vpow.pop %v468
          %v470 = vadd.f32 %v467, 1.0
          %v471 = vadd.f32 %v469, 1.0
          %v472 = vrcp.pop %v470
          %v473 = vmul.f32 0.1, %v472
          %v474 = vrcp.pop %v471
          %v475 = vmul.f32 0.1, %v474
          %v476 = vsub.f32 %v454, %v473
          %v477 = vsub.f32 %v456, %v475
          %v478 = vsel %vm434, %v476, 0.0
          %v479 = vsel %vm434, %v477, 0.0
          %vm480 = vcmp.ge.f32.partialorder %v478, 0.0
          %vm481 = vcmp.ge.f32.partialorder %v479, 0.0
          %v482 = vsel %vm480, 1, 0
          %v483 = vsel %vm481, 1, 0
          %v484 = vcvt.s32.f32 %v482
          %v485 = vcvt.s32.f32 %v483
          %v486 = vsel %vm434, %v484, 0.0
          %v487 = vsel %vm434, %v485, 0.0
          %v488 = vmul.f32 %v478, %v486
          %v489 = vmul.f32 %v479, %v487
          %490 = vadd.xlane.f32.xlu0 %v488
          %v491 = vpop.xlane.xlu0 %490
          %492 = vadd.xlane.f32.xlu0 %v489
          %v493 = vpop.xlane.xlu0 %492
          %vm494 = vcmp.eq.f32.partialorder %v491, 0.0
          %vm495 = vcmp.eq.f32.partialorder %v493, 0.0
          %v496 = vsel %vm494, 1.0, %v491
          %v497 = vsel %vm495, 1.0, %v493
          %v498 = vrcp.pop %v496
          %v499 = vmul.f32 %v488, %v498
          %v500 = vrcp.pop %v497
          %v501 = vmul.f32 %v489, %v500
          %v502 = vlaneseq
          %v503 = vshrl.u32 %v502, 7
          %v504 = vadd.s32 %v503, 8
          %v505 = vstv %s350
          %v506 = vadd.s32 %v503, %v505
          %v507 = vadd.s32 %v504, %v505
          %vm508 = vcmp.lt.s32.totalorder %v506, 16
          %vm509 = vcmp.lt.s32.totalorder %v507, 16
          %v510 = vsel %vm508, 1, 0
          %v511 = vsel %vm509, 1, 0
          %v512 = vcvt.s32.f32 %v510
          %v513 = vcvt.s32.f32 %v511
          %v514 = vmul.f32 %v499, %v512
          %v515 = vmul.f32 %v501, %v513
          %516 = vst [vmem:[#allocation3] sm:$0xff] %v514
          %517 = vst [vmem:[#allocation3 + $0x8] sm:$0xff] %v515
          %v518 = vmul.f32 %v478, %v512
          %v519 = vmul.f32 %v479, %v513
          %v520 = vadd.f32 %v518, %v519
          %v521 = vrot.slane %v520, 4
          %v522 = vadd.f32 %v520, %v521
          %v523 = vrot.slane %v522, 2
          %v524 = vadd.f32 %v522, %v523
          %v525 = vrot.slane %v524, 1
          %v526 = vadd.f32 %v524, %v525
          %v527 = vmul.f32 %v486, %v512
          %v528 = vmul.f32 %v487, %v513
          %v529 = vadd.f32 %v527, %v528
          %v530 = vrot.slane %v529, 4
          %v531 = vadd.f32 %v529, %v530
          %v532 = vrot.slane %v531, 2
          %v533 = vadd.f32 %v531, %v532
          %v534 = vrot.slane %v533, 1
          %v535 = vadd.f32 %v533, %v534
          %vm536 = vcmp.eq.s32.totalorder %v503, 0
          %vm537 = vcmp.eq.s32.totalorder %v503, 1
          %v538 = vsel %vm537, %v535, 0.0
          %v539 = vsel %vm536, %v526, %v538
          %540 = vst [vmem:[#allocation12] sm:$0xff] %v539
        $region60: #{tpu_custom_call.1} parent=39 // pred_fallthru
          _
        // Predicated region
        $region61: #{tpu_custom_call.1} parent=39 // pred_check
          %p541 = pneg %p352
        $region62: #{tpu_custom_call.1} parent=39 // pred_check_branch
          %543 = sbr.rel (%p541) target = $region64
        $region63: #{tpu_custom_call.1} parent=39 // pred_region
          %544 = vst [vmem:[#allocation2] sm:$0xff] 0.0
          %545 = vst [vmem:[#allocation2 + $0x8] sm:$0xff] 0.0
        $region64: #{tpu_custom_call.1} parent=39 // pred_fallthru
          _
        %v546 = vlaneseq
        %v547 = vand.u32 %v546, 127
        %v548 = vstv %s29
        %vm549 = vcmp.eq.s32.totalorder %v547, %v548
        %v550 = vld [vmem:[#allocation3] sm:$0xff]
        %v551 = vld [vmem:[#allocation3 + $0x8] sm:$0xff]
        %v552 = vsel %vm549, %v550, 0.0
        %v553 = vsel %vm549, %v551, 0.0
        %554 = vadd.xlane.f32.xlu0 %v552
        %v555 = vpop.xlane.xlu0 %554
        %556 = vadd.xlane.f32.xlu0 %v553
        %v557 = vpop.xlane.xlu0 %556
        %v558 = vld [vmem:[#allocation2] sm:$0xff]
        %v559 = vld [vmem:[#allocation2 + $0x8] sm:$0xff]
        %v560 = vld [vmem:[#allocation4] sm:$0xf]
        %v561 = vld [vmem:[#allocation4 + $0x4] sm:$0xf]
        %v562 = vld [vmem:[%s319] sm:$0xf]
        %v563 = vld [vmem:[%s319 + $0x4] sm:$0xf]
        %v564 = vld [vmem:[%s319 + $0x8] sm:$0xf]
        %v565 = vld [vmem:[%s319 + $0xc] sm:$0xf]
        %v568 = vunpack.c.l.b16 %v560
        %v569 = vunpack.c.l.b16 %v561
        %v570 = vpack.c.b16 %v569, %v568
        %v575 = vunpack.c.l.b16 %v562
        %v576 = vunpack.c.l.b16 %v563
        %v577 = vunpack.c.l.b16 %v564
        %v578 = vunpack.c.l.b16 %v565
        %v579 = vpack.c.b16 %v576, %v575
        %v580 = vpack.c.b16 %v578, %v577
        %vm583 = vcmask 261120
        %v585 = vsel %vm583, %v570, 0
        %587 = vmatprep.subr.bf16.mxu0 0
        %588 = vmatpush1.bf16.msra.mxu0 %v579
        %589 = vmatprep.subr.bf16.mxu0 0
        %590 = vmatpush1.bf16.msra.mxu0 %v580
        %591 = vmatprep.subr.bf16.mxu0 0
        %592 = vmatpush1.bf16.msra.mxu0 0
        %593 = vmatprep.subr.bf16.mxu0 0
        %594 = vmatpush1.bf16.msra.mxu0 0
        %595 = vmatprep.subr.bf16.mxu0 0
        %596 = vmatpush1.bf16.msra.mxu0 0
        %597 = vmatprep.subr.bf16.mxu0 0
        %598 = vmatpush1.bf16.msra.mxu0 0
        %599 = vmatprep.subr.bf16.mxu0 0
        %600 = vmatpush1.bf16.msra.mxu0 0
        %601 = vmatprep.subr.bf16.mxu0 0
        %602 = vmatpush1.bf16.msra.mxu0 0
        %603 = vmatprep.subr.bf16.mxu0 0
        %604 = vmatpush1.bf16.msra.mxu0 0
        %605 = vmatprep.subr.bf16.mxu0 0
        %606 = vmatpush1.bf16.msra.mxu0 0
        %607 = vmatprep.subr.bf16.mxu0 0
        %608 = vmatpush1.bf16.msra.mxu0 0
        %609 = vmatprep.subr.bf16.mxu0 0
        %610 = vmatpush1.bf16.msra.mxu0 0
        %611 = vmatprep.subr.bf16.mxu0 0
        %612 = vmatpush1.bf16.msra.mxu0 0
        %613 = vmatprep.subr.bf16.mxu0 0
        %614 = vmatpush1.bf16.msra.mxu0 0
        %615 = vmatprep.subr.bf16.mxu0 0
        %616 = vmatpush1.bf16.msra.mxu0 0
        %617 = vmatprep.subr.bf16.mxu0 0
        %618 = vmatpush1.bf16.msra.mxu0 0
        %619 = vmatprep.mubr.bf16.mxu0 0
        %620 = vmatmul.mubr.bf16.gmra.mrb[0].mxu0 %v585
        %v621 = vpop.f32.mrb[0].mxu0
        %v622 = vadd.f32 0.0, %v621
        %v623 = vpop.f32.mrb[0].mxu0
        %v624 = vpop.f32.mrb[0].mxu0
        %v625 = vadd.f32 0.0, %v624
        %v626 = vpop.f32.mrb[0].mxu0
        %627 = vdwg.mxu0
        %v628 = vmul.f32 %v555, %v622
        %v629 = vmul.f32 %v557, %v625
        %v630 = vadd.f32 %v558, %v628
        %v631 = vadd.f32 %v559, %v629
        %632 = vst [vmem:[#allocation2] sm:$0xff] %v630
        %633 = vst [vmem:[#allocation2 + $0x8] sm:$0xff] %v631
        %p634 = scmp.eq.s32.totalorder %s29, 7
        // Predicated region
        $region65: #{tpu_custom_call.1} parent=39 // pred_check
          %p635 = pneg %p634
        $region66: #{tpu_custom_call.1} parent=39 // pred_check_branch
          %637 = sbr.rel (%p635) target = $region68
        $region67: #{tpu_custom_call.1} parent=39 // pred_region
          %v638 = vld [vmem:[#allocation2] sm:$0xff]
          %v639 = vld [vmem:[#allocation2 + $0x8] sm:$0xff]
          %v640 = vld [vmem:[#allocation3] sm:$0xff]
          %v641 = vld [vmem:[#allocation3 + $0x8] sm:$0xff]
          %v642 = vld [vmem:[#allocation10] sm:$0xff]
          %v643 = vld [vmem:[#allocation10 + $0x8] sm:$0xff]
          %v644 = vld [vmem:[#allocation10 + $0x10] sm:$0xff]
          %v645 = vld [vmem:[#allocation10 + $0x18] sm:$0xff]
          %v646 = vld [vmem:[#allocation10 + $0x20] sm:$0xff]
          %v647 = vld [vmem:[#allocation10 + $0x28] sm:$0xff]
          %v648 = vld [vmem:[#allocation10 + $0x30] sm:$0xff]
          %v649 = vld [vmem:[#allocation10 + $0x38] sm:$0xff]
          %v650 = vld [vmem:[#allocation10 + $0x40] sm:$0xff]
          %v651 = vld [vmem:[#allocation10 + $0x48] sm:$0xff]
          %v652 = vld [vmem:[#allocation10 + $0x50] sm:$0xff]
          %v653 = vld [vmem:[#allocation10 + $0x58] sm:$0xff]
          %v654 = vld [vmem:[#allocation10 + $0x60] sm:$0xff]
          %v655 = vld [vmem:[#allocation10 + $0x68] sm:$0xff]
          %v656 = vld [vmem:[#allocation10 + $0x70] sm:$0xff]
          %v657 = vld [vmem:[#allocation10 + $0x78] sm:$0xff]
          %658 = vmatprep.subr.mxu0 0.0
          %659 = vmatpush1.msra.mxu0 %v642
          %660 = vmatprep.subr.mxu0 0.0
          %661 = vmatpush1.msra.mxu0 %v643
          %662 = vmatprep.subr.mxu0 0.0
          %663 = vmatpush1.msra.mxu0 %v644
          %664 = vmatprep.subr.mxu0 0.0
          %665 = vmatpush1.msra.mxu0 %v645
          %666 = vmatprep.subr.mxu0 0.0
          %667 = vmatpush1.msra.mxu0 %v646
          %668 = vmatprep.subr.mxu0 0.0
          %669 = vmatpush1.msra.mxu0 %v647
          %670 = vmatprep.subr.mxu0 0.0
          %671 = vmatpush1.msra.mxu0 %v648
          %672 = vmatprep.subr.mxu0 0.0
          %673 = vmatpush1.msra.mxu0 %v649
          %674 = vmatprep.subr.mxu0 0.0
          %675 = vmatpush1.msra.mxu0 %v650
          %676 = vmatprep.subr.mxu0 0.0
          %677 = vmatpush1.msra.mxu0 %v651
          %678 = vmatprep.subr.mxu0 0.0
          %679 = vmatpush1.msra.mxu0 %v652
          %680 = vmatprep.subr.mxu0 0.0
          %681 = vmatpush1.msra.mxu0 %v653
          %682 = vmatprep.subr.mxu0 0.0
          %683 = vmatpush1.msra.mxu0 %v654
          %684 = vmatprep.subr.mxu0 0.0
          %685 = vmatpush1.msra.mxu0 %v655
          %686 = vmatprep.subr.mxu0 0.0
          %687 = vmatpush1.msra.mxu0 %v656
          %688 = vmatprep.subr.mxu0 0.0
          %689 = vmatpush1.msra.mxu0 %v657
          %690 = vmatprep.subr.mxu0 0.0
          %691 = vmatpush1.msra.mxu0 0.0
          %692 = vmatprep.subr.mxu0 0.0
          %693 = vmatpush1.msra.mxu0 0.0
          %694 = vmatprep.subr.mxu0 0.0
          %695 = vmatpush1.msra.mxu0 0.0
          %696 = vmatprep.subr.mxu0 0.0
          %697 = vmatpush1.msra.mxu0 0.0
          %698 = vmatprep.subr.mxu0 0.0
          %699 = vmatpush1.msra.mxu0 0.0
          %700 = vmatprep.subr.mxu0 0.0
          %701 = vmatpush1.msra.mxu0 0.0
          %702 = vmatprep.subr.mxu0 0.0
          %703 = vmatpush1.msra.mxu0 0.0
          %704 = vmatprep.subr.mxu0 0.0
          %705 = vmatpush1.msra.mxu0 0.0
          %706 = vmatprep.subr.mxu0 0.0
          %707 = vmatpush1.msra.mxu0 0.0
          %708 = vmatprep.subr.mxu0 0.0
          %709 = vmatpush1.msra.mxu0 0.0
          %710 = vmatprep.subr.mxu0 0.0
          %711 = vmatpush1.msra.mxu0 0.0
          %712 = vmatprep.subr.mxu0 0.0
          %713 = vmatpush1.msra.mxu0 0.0
          %714 = vmatprep.subr.mxu0 0.0
          %715 = vmatpush1.msra.mxu0 0.0
          %716 = vmatprep.subr.mxu0 0.0
          %717 = vmatpush1.msra.mxu0 0.0
          %718 = vmatprep.subr.mxu0 0.0
          %719 = vmatpush1.msra.mxu0 0.0
          %720 = vmatprep.subr.mxu0 0.0
          %721 = vmatpush1.msra.mxu0 0.0
          %722 = vmatprep.mubr.f32.mxu0 0.0
          %723 = vmatmul.mubr.f32.gmra.mrb[0].mxu0 %v640
          %v724 = vpop.f32.mrb[0].mxu0
          %v725 = vadd.f32 0.0, %v724
          %v726 = vpop.f32.mrb[0].mxu0
          %727 = vmatprep.mubr.f32.mxu0 0.0
          %728 = vmatmul.mubr.f32.gmra.mrb[0].mxu0 %v641
          %v729 = vpop.f32.mrb[0].mxu0
          %v730 = vadd.f32 0.0, %v729
          %v731 = vpop.f32.mrb[0].mxu0
          %732 = vdwg.mxu0
          %v733 = vadd.f32 %v638, %v725
          %v734 = vadd.f32 %v639, %v730
          %v735 = vpack.c.bf16 %v734, %v733
          %v737 = vunpack.c.l.b16 %v735
          %v738 = vunpack.c.h.b16 %v735
          %v739 = vpack.c.b16 %v737, %v737
          %v740 = vpack.c.b16 %v738, %v738
          %743 = vst [vmem:[#allocation11] sm:$0xf] %v739
          %744 = vst [vmem:[#allocation11 + $0x4] sm:$0xf] %v740
        $region68: #{tpu_custom_call.1} parent=39 // pred_fallthru
          _
        // Predicated region
        $region69: #{tpu_custom_call.1} parent=39 // pred_check
          %p745 = pneg %p183
        $region70: #{tpu_custom_call.1} parent=39 // pred_check_branch
          %747 = sbr.rel (%p745) target = $region72
        $region71: #{tpu_custom_call.1} parent=39 // pred_region
          %s748 = smul.u32 2, %s27
          %s750 = ssub.s32 128, 128
          %751 = vsyncadd [#allocation6], %s750
          %s752 = sadd.s32 %s28, %s748
          %s753 = smul.addr %s752, 64
          %s754 = scalar_lea.hbm %s5, %s753
          %s755 = sshll.u32 [#allocation11], 4
          %s756 = int_to_ptr.vmem [resolvable:$true] %s755
          %761 = dma.vmem_to_hbm [thread:$0]  %s756, 128, %s754, [#allocation6], 64, 64, 4
        $region72: #{tpu_custom_call.1} parent=39 // pred_fallthru
          _
        // Predicated region
        $region73: #{tpu_custom_call.1} parent=39 // pred_check
          %p762 = pneg %p209
        $region74: #{tpu_custom_call.1} parent=39 // pred_check_branch
          %764 = sbr.rel (%p762) target = $region76
        $region75: #{tpu_custom_call.1} parent=39 // pred_region
          %s766 = ssub.s32 128, 128
          %767 = vsyncadd [#allocation13], %s766
          %s768 = smul.addr %s27, 128
          %s769 = scalar_lea.hbm %s6, %s768
          %s771 = sshll.u32 [#allocation12], 4
          %s772 = int_to_ptr.vmem [resolvable:$true] %s771
          %774 = dma.vmem_to_hbm [thread:$0]  %s772, 128, %s769, [#allocation13]
        $region76: #{tpu_custom_call.1} parent=39 // pred_fallthru
          _
        // Predicated region
        $region77: #{tpu_custom_call.1} parent=39 // pred_check
          %p775 = pneg %p183
        $region78: #{tpu_custom_call.1} parent=39 // pred_check_branch
          %777 = sbr.rel (%p775) target = $region80
        $region79: #{tpu_custom_call.1} parent=39 // pred_region
          %778 = dma.done [#allocation6], 128
        $region80: #{tpu_custom_call.1} parent=39 // pred_fallthru
          _
        // Predicated region
        $region81: #{tpu_custom_call.1} parent=39 // pred_check
          %p779 = pneg %p209
        $region82: #{tpu_custom_call.1} parent=39 // pred_check_branch
          %781 = sbr.rel (%p779) target = $region84
        $region83: #{tpu_custom_call.1} parent=39 // pred_region
          %782 = dma.done [#allocation13], 128
        $region84: #{tpu_custom_call.1} parent=39 // pred_fallthru
          _
      $region40: #{tpu_custom_call.1} parent=5 // pred_fallthru
        _
      %p783 = scmp.le.s32.totalorder 2, %s17
      // Predicated region
      $region85: #{tpu_custom_call.1} parent=5 // pred_check
        %p784 = pneg %p783
      $region86: #{tpu_custom_call.1} parent=5 // pred_check_branch
        %786 = sbr.rel (%p784) target = $region88
      $region87: #{tpu_custom_call.1} parent=5 // pred_region
        %s787 = ssub.s32 %s17, 2
      $region88: #{tpu_custom_call.1} parent=5 // pred_fallthru
        _
    $region6: #{tpu_custom_call.1} parent=1 // loop_footer
      %s21 = sadd.s32 1, %s17
    $region7: #{tpu_custom_call.1} parent=1 // loop_footer_branch
      %16 = sbr.rel target = $region3
    $region8: #{tpu_custom_call.1} parent=1 // loop_exit
      _
    %788 = vsyncpa [#allocation5], 1
    %s789 = scalar_lea.sflag [#allocation5], 1
    %790 = vsyncpa %s789, 1
    %791 = vsyncpa [#allocation8], 1
    %792 = vsyncpa [#allocation6], 1
    %s793 = scalar_lea.sflag [#allocation6], 1
    %794 = vsyncpa %s793, 1
    %795 = vsyncpa [#allocation13], 1

</llo_original>
